<compile_context>
chip_gen: v5e
topology: v5e:2x2
jax: 0.10.0
libtpu: 0.0.40
codegen_flags: <defaults>
</compile_context>

<pallas_src>
import jax
import jax.numpy as jnp
from jax import lax
from jax.experimental import pallas as pl
from jax.experimental.pallas import tpu as pltpu


def _round_up(x, m):
    return (x + m - 1) // m * m


def _vmem_capacity_bytes():
    """Per-core VMEM capacity; conservative fallback if the query fails."""
    try:
        info = pltpu.get_tpu_info()
        cap = getattr(info, "vmem_capacity_bytes", None)
        if cap:
            return int(cap)
    except Exception:
        pass
    return 64 << 20  # v7x per-TensorCore VMEM (the smallest current gen)


def _choose_spatial_tile(S, C, cap_f32_bytes, align):
    """Largest spatial tile TS (sublane rows of 128 lanes), multiple of
    `align`, keeping the f32 logits block C*TS*128*4 under cap_f32_bytes.
    S is padded up to a multiple of TS by the caller, so TS need not divide S."""
    ts_cap = cap_f32_bytes // (C * 128 * 4)
    ts_cap = max(align, ts_cap - ts_cap % align)
    return int(min(ts_cap, _round_up(max(S, 1), align)))


def _combined_loss_kernel(x_ref, t_ref, ce_ref, inter_ref, union_ref):
    x = x_ref[0].astype(jnp.float32)       # (C, TS, L) logits (f32 compute)
    t = t_ref[0, 0].astype(jnp.int32)      # (TS, L)    target ids; -1 == pad

    C = x.shape[0]
    # Per-class bool mask without materializing a full (C,TS,128) int32 iota:
    class_ids = lax.broadcasted_iota(jnp.int32, (C, 1, 1), 0)
    mask = class_ids == t[None]            # (C, TS, L) bool
    valid = t >= 0                         # (TS, L)    bool (padded pixels out)

    # Softmax over the class (leading) axis -> pure VPU adds/maxes on
    # fully-populated (TS,128) vregs even for small C.
    m = jnp.max(x, axis=0)                                      # (TS, L)
    e = jnp.exp(x - m[None])                                    # (C, TS, L)
    ssum = jnp.sum(e, axis=0)                                   # (TS, L)
    inv_s = 1.0 / ssum                                          # exact: keeps 1e-5
    p = e * inv_s[None]                                         # (C, TS, L)

    # Cross entropy per pixel without materializing log-softmax:
    #   -log p[target] = log(sum_exp) + max - x[target]
    x_t = jnp.sum(jnp.where(mask, x, 0.0), axis=0)              # (TS, L)
    ce_tile = jnp.where(valid, jnp.log(ssum) + m - x_t, 0.0)    # (TS, L)

    # Per-tile lane-vector / per-class-lane partials (no cross-grid accumulator,
    # no read-modify-write; the tiny cross-lane reduce happens in JAX outside).
    ce_ref[0, 0] = jnp.sum(ce_tile, axis=0, keepdims=True)                # (1, L)
    inter_ref[0, 0] = jnp.sum(jnp.where(mask, p, 0.0), axis=1)            # (C, L)
    union_ref[0, 0] = (jnp.sum(jnp.where(valid[None], p, 0.0), axis=1)
                       + jnp.sum(jnp.where(mask, 1.0, 0.0), axis=1))      # (C, L)


def combined_loss(logits_nchw, targets_nhw, *, ce_weight=1.0, dice_weight=1.0,
                  smooth=1.0):
    """logits_nchw: [B, C, H, W] float (any float dtype); targets_nhw: [B, H, W] int."""
    B, C, H, W = logits_nchw.shape
    HW = H * W
    L = 128

    # Generation-aware sizing: block cap ~ VMEM/16 (8 MiB on 128-MiB chips,
    # 4 MiB on v7x's 64 MiB), explicit scoped-VMEM limit = 3/4 of capacity.
    vmem_cap = _vmem_capacity_bytes()
    cap_f32_block = max(1 << 20, vmem_cap // 16)
    vmem_limit = int(vmem_cap * 3 // 4)

    # int8 targets (4x less target DMA) when class ids + the -1 pad sentinel fit.
    use_int8_targets = C <= 127
    t_dtype = jnp.int8 if use_int8_targets else jnp.int32
    align = 32 if use_int8_targets else 8   # (32,128) packed tile for int8

    S = pl.cdiv(HW, L)
    TS = _choose_spatial_tile(S, C, cap_f32_block, align)
    S_pad = _round_up(S, TS)
    n_s = S_pad // TS
    pad = S_pad * L - HW

    # Lane-dense spatial layout with explicit padding; padded pixels get
    # target = -1 so they match no class and are masked out in the kernel.
    x = jnp.pad(logits_nchw.reshape(B, C, HW),
                ((0, 0), (0, 0), (0, pad))).reshape(B, C, S_pad, L)
    t = jnp.pad(targets_nhw.reshape(B, HW).astype(t_dtype),
                ((0, 0), (0, pad)), constant_values=-1).reshape(B, 1, S_pad, L)

    ce_part, inter_part, union_part = pl.pallas_call(
        _combined_loss_kernel,
        out_shape=(
            jax.ShapeDtypeStruct((B, n_s, 1, L), jnp.float32),   # CE lane partials
            jax.ShapeDtypeStruct((B, n_s, C, L), jnp.float32),   # intersection partials
            jax.ShapeDtypeStruct((B, n_s, C, L), jnp.float32),   # union partials
        ),
        grid_spec=pltpu.PrefetchScalarGridSpec(
            num_scalar_prefetch=0,
            grid=(B, n_s),
            in_specs=[
                pl.BlockSpec((1, C, TS, L), lambda b, s: (b, 0, s, 0)),
                pl.BlockSpec((1, 1, TS, L), lambda b, s: (b, 0, s, 0)),
            ],
            out_specs=[
                pl.BlockSpec((1, 1, 1, L), lambda b, s: (b, s, 0, 0)),
                pl.BlockSpec((1, 1, C, L), lambda b, s: (b, s, 0, 0)),
                pl.BlockSpec((1, 1, C, L), lambda b, s: (b, s, 0, 0)),
            ],
        ),
        compiler_params=pltpu.CompilerParams(
            # Every grid step writes its own output block -> both axes are
            # independent; on v7x both TensorCores get work even when B == 1.
            dimension_semantics=("parallel", "parallel"),
            vmem_limit_bytes=vmem_limit,
        ),
    )(x, t)

    # Tiny finalize in plain JAX (cross-lane/tile reduce + weighted mean).
    ce = jnp.sum(ce_part) / jnp.float32(B * HW)          # mean over real pixels
    inter = jnp.sum(inter_part, axis=(1, 3))             # (B, C)
    union = jnp.sum(union_part, axis=(1, 3))             # (B, C)
    dice_score = (2.0 * inter + smooth) / (union + smooth)
    dice = jnp.mean(1.0 - dice_score)                    # mean over (B, C)
    return ce_weight * ce + dice_weight * dice


def _reference_combined_loss(logits, targets, ce_weight=1.0, dice_weight=1.0,
                             smooth=1.0):
    """Pure-JAX reference matching the PyTorch CombinedLoss semantics."""
    B, C, H, W = logits.shape
    logp = jax.nn.log_softmax(logits.astype(jnp.float32), axis=1)
    one_hot = jax.nn.one_hot(targets, C, axis=1, dtype=jnp.float32)  # [B,C,H,W]
    ce = -jnp.mean(jnp.sum(one_hot * logp, axis=1))
    p = jax.nn.softmax(logits.astype(jnp.float32), axis=1)
    inter = jnp.sum(p * one_hot, axis=(2, 3))
    union = jnp.sum(p, axis=(2, 3)) + jnp.sum(one_hot, axis=(2, 3))
    dice = jnp.mean(1.0 - (2.0 * inter + smooth) / (union + smooth))
    return ce_weight * ce + dice_weight * dice


if __name__ == "__main__":
    key = jax.random.PRNGKey(0)
    k1, k2 = jax.random.split(key)

    B, C, H, W = 2, 4, 16, 16
    logits = jax.random.normal(k1, (B, C, H, W), dtype=jnp.float32)
    targets = jax.random.randint(k2, (B, H, W), 0, C, dtype=jnp.int32)

    loss = jax.block_until_ready(combined_loss(logits, targets))
    ref = jax.block_until_ready(_reference_combined_loss(logits, targets))

    assert jnp.allclose(loss, ref, atol=1e-5, rtol=1e-5), (loss, ref)
    print("KERNEL_OK")
</pallas_src>

<mosaic_0001>
module attributes {stable_mosaic.version = 11 : i64} {
  func.func @_combined_loss_kernel(%arg0: i32, %arg1: i32, %arg2: memref<1x4x32x128xf32, #tpu.memory_space<vmem>>, %arg3: memref<1x1x32x128xi8, #tpu.memory_space<vmem>>, %arg4: memref<1x1x1x128xf32, #tpu.memory_space<vmem>>, %arg5: memref<1x1x4x128xf32, #tpu.memory_space<vmem>>, %arg6: memref<1x1x4x128xf32, #tpu.memory_space<vmem>>) attributes {dimension_semantics = [#tpu.dimension_semantics<parallel>, #tpu.dimension_semantics<parallel>], iteration_bounds = array<i64: 2, 1>, scalar_prefetch = 0 : i64, scratch_operands = 0 : i64, tpu.core_type = #tpu.core_type<tc>, window_params = [{transform_indices = @transform_0, window_bounds = array<i64: 1, 4, 32, 128>}, {transform_indices = @transform_1, window_bounds = array<i64: 1, 1, 32, 128>}, {transform_indices = @transform_2, window_bounds = array<i64: 1, 1, 1, 128>}, {transform_indices = @transform_3, window_bounds = array<i64: 1, 1, 4, 128>}, {transform_indices = @transform_4, window_bounds = array<i64: 1, 1, 4, 128>}]} {
    %c0 = arith.constant 0 : index
    %c0_0 = arith.constant 0 : index
    %c0_1 = arith.constant 0 : index
    %c0_2 = arith.constant 0 : index
    %0 = vector.load %arg2[%c0, %c0_0, %c0_1, %c0_2] : memref<1x4x32x128xf32, #tpu.memory_space<vmem>>, vector<1x4x32x128xf32>
    %1 = vector.shape_cast %0 : vector<1x4x32x128xf32> to vector<4x32x128xf32>
    %c0_3 = arith.constant 0 : index
    %c0_4 = arith.constant 0 : index
    %c0_5 = arith.constant 0 : index
    %c0_6 = arith.constant 0 : index
    %2 = vector.load %arg3[%c0_3, %c0_4, %c0_5, %c0_6] : memref<1x1x32x128xi8, #tpu.memory_space<vmem>>, vector<1x1x32x128xi8>
    %3 = vector.shape_cast %2 : vector<1x1x32x128xi8> to vector<32x128xi8>
    %4 = arith.extsi %3 : vector<32x128xi8> to vector<32x128xi32>
    %5 = tpu.iota {dimensions = array<i32: 0>} : vector<4x1x1xi32>
    %6 = vector.shape_cast %4 : vector<32x128xi32> to vector<1x32x128xi32>
    %7 = vector.broadcast %5 : vector<4x1x1xi32> to vector<4x32x128xi32>
    %8 = vector.broadcast %6 : vector<1x32x128xi32> to vector<4x32x128xi32>
    %9 = arith.cmpi eq, %7, %8 : vector<4x32x128xi32>
    %c0_i32 = arith.constant 0 : i32
    %10 = vector.broadcast %c0_i32 : i32 to vector<32x128xi32>
    %11 = arith.cmpi sge, %4, %10 : vector<32x128xi32>
    %cst = arith.constant dense<0xFF800000> : vector<32x128xf32>
    %12 = vector.multi_reduction <maximumf>, %1, %cst [0] : vector<4x32x128xf32> to vector<32x128xf32>
    %13 = vector.shape_cast %12 : vector<32x128xf32> to vector<1x32x128xf32>
    %14 = vector.broadcast %13 : vector<1x32x128xf32> to vector<4x32x128xf32>
    %15 = arith.subf %1, %14 : vector<4x32x128xf32>
    %16 = math.exp %15 : vector<4x32x128xf32>
    %cst_7 = arith.constant dense<0.000000e+00> : vector<32x128xf32>
    %17 = vector.multi_reduction <add>, %16, %cst_7 [0] : vector<4x32x128xf32> to vector<32x128xf32>
    %cst_8 = arith.constant 1.000000e+00 : f32
    %18 = vector.broadcast %cst_8 : f32 to vector<32x128xf32>
    %19 = arith.divf %18, %17 : vector<32x128xf32>
    %20 = vector.shape_cast %19 : vector<32x128xf32> to vector<1x32x128xf32>
    %21 = vector.broadcast %20 : vector<1x32x128xf32> to vector<4x32x128xf32>
    %22 = arith.mulf %16, %21 : vector<4x32x128xf32>
    %cst_9 = arith.constant 0.000000e+00 : f32
    %23 = vector.broadcast %cst_9 : f32 to vector<4x32x128xf32>
    %24 = arith.select %9, %1, %23 : vector<4x32x128xi1>, vector<4x32x128xf32>
    %cst_10 = arith.constant dense<0.000000e+00> : vector<32x128xf32>
    %25 = vector.multi_reduction <add>, %24, %cst_10 [0] : vector<4x32x128xf32> to vector<32x128xf32>
    %26 = math.log %17 : vector<32x128xf32>
    %27 = arith.addf %26, %12 : vector<32x128xf32>
    %28 = arith.subf %27, %25 : vector<32x128xf32>
    %cst_11 = arith.constant 0.000000e+00 : f32
    %29 = vector.broadcast %cst_11 : f32 to vector<32x128xf32>
    %30 = arith.select %11, %28, %29 : vector<32x128xi1>, vector<32x128xf32>
    %cst_12 = arith.constant dense<0.000000e+00> : vector<128xf32>
    %31 = vector.multi_reduction <add>, %30, %cst_12 [0] : vector<32x128xf32> to vector<128xf32>
    %32 = vector.shape_cast %31 : vector<128xf32> to vector<1x128xf32>
    %c0_13 = arith.constant 0 : index
    %c0_14 = arith.constant 0 : index
    %c0_15 = arith.constant 0 : index
    %c0_16 = arith.constant 0 : index
    %33 = vector.load %arg4[%c0_13, %c0_14, %c0_15, %c0_16] : memref<1x1x1x128xf32, #tpu.memory_space<vmem>>, vector<1x1x1x128xf32>
    %34 = vector.shape_cast %33 : vector<1x1x1x128xf32> to vector<1x128xf32>
    %35 = vector.shape_cast %32 : vector<1x128xf32> to vector<1x1x1x128xf32>
    tpu.vector_store %arg4[%c0_13, %c0_14, %c0_15, %c0_16], %35 {strides = array<i32>} : memref<1x1x1x128xf32, #tpu.memory_space<vmem>>, vector<1x1x1x128xf32>,
    %cst_17 = arith.constant 0.000000e+00 : f32
    %36 = vector.broadcast %cst_17 : f32 to vector<4x32x128xf32>
    %37 = arith.select %9, %22, %36 : vector<4x32x128xi1>, vector<4x32x128xf32>
    %cst_18 = arith.constant dense<0.000000e+00> : vector<4x128xf32>
    %38 = vector.multi_reduction <add>, %37, %cst_18 [1] : vector<4x32x128xf32> to vector<4x128xf32>
    %c0_19 = arith.constant 0 : index
    %c0_20 = arith.constant 0 : index
    %c0_21 = arith.constant 0 : index
    %c0_22 = arith.constant 0 : index
    %39 = vector.load %arg5[%c0_19, %c0_20, %c0_21, %c0_22] : memref<1x1x4x128xf32, #tpu.memory_space<vmem>>, vector<1x1x4x128xf32>
    %40 = vector.shape_cast %39 : vector<1x1x4x128xf32> to vector<4x128xf32>
    %41 = vector.shape_cast %38 : vector<4x128xf32> to vector<1x1x4x128xf32>
    tpu.vector_store %arg5[%c0_19, %c0_20, %c0_21, %c0_22], %41 {strides = array<i32>} : memref<1x1x4x128xf32, #tpu.memory_space<vmem>>, vector<1x1x4x128xf32>,
    %42 = vector.shape_cast %11 : vector<32x128xi1> to vector<1x32x128xi1>
    %cst_23 = arith.constant 0.000000e+00 : f32
    %43 = vector.shape_cast %42 : vector<1x32x128xi1> to vector<1x32x128xi1>
    %44 = vector.broadcast %43 : vector<1x32x128xi1> to vector<4x32x128xi1>
    %45 = vector.broadcast %cst_23 : f32 to vector<4x32x128xf32>
    %46 = arith.select %44, %22, %45 : vector<4x32x128xi1>, vector<4x32x128xf32>
    %cst_24 = arith.constant dense<0.000000e+00> : vector<4x128xf32>
    %47 = vector.multi_reduction <add>, %46, %cst_24 [1] : vector<4x32x128xf32> to vector<4x128xf32>
    %cst_25 = arith.constant 1.000000e+00 : f32
    %cst_26 = arith.constant 0.000000e+00 : f32
    %48 = vector.broadcast %cst_25 : f32 to vector<4x32x128xf32>
    %49 = vector.broadcast %cst_26 : f32 to vector<4x32x128xf32>
    %50 = arith.select %9, %48, %49 : vector<4x32x128xi1>, vector<4x32x128xf32>
    %cst_27 = arith.constant dense<0.000000e+00> : vector<4x128xf32>
    %51 = vector.multi_reduction <add>, %50, %cst_27 [1] : vector<4x32x128xf32> to vector<4x128xf32>
    %52 = arith.addf %47, %51 : vector<4x128xf32>
    %c0_28 = arith.constant 0 : index
    %c0_29 = arith.constant 0 : index
    %c0_30 = arith.constant 0 : index
    %c0_31 = arith.constant 0 : index
    %53 = vector.load %arg6[%c0_28, %c0_29, %c0_30, %c0_31] : memref<1x1x4x128xf32, #tpu.memory_space<vmem>>, vector<1x1x4x128xf32>
    %54 = vector.shape_cast %53 : vector<1x1x4x128xf32> to vector<4x128xf32>
    %55 = vector.shape_cast %52 : vector<4x128xf32> to vector<1x1x4x128xf32>
    tpu.vector_store %arg6[%c0_28, %c0_29, %c0_30, %c0_31], %55 {strides = array<i32>} : memref<1x1x4x128xf32, #tpu.memory_space<vmem>>, vector<1x1x4x128xf32>,
    return
  }
  func.func @transform_0(%arg0: i32, %arg1: i32) -> (i32, i32, i32, i32) {
    %c0_i32 = arith.constant 0 : i32
    %c0_i32_0 = arith.constant 0 : i32
    %c0_i32_1 = arith.constant 0 : i32
    return %arg0, %c0_i32, %arg1, %c0_i32_0 : i32, i32, i32, i32
  }
  func.func @transform_1(%arg0: i32, %arg1: i32) -> (i32, i32, i32, i32) {
    %c0_i32 = arith.constant 0 : i32
    %c0_i32_0 = arith.constant 0 : i32
    %c0_i32_1 = arith.constant 0 : i32
    return %arg0, %c0_i32, %arg1, %c0_i32_0 : i32, i32, i32, i32
  }
  func.func @transform_2(%arg0: i32, %arg1: i32) -> (i32, i32, i32, i32) {
    %c0_i32 = arith.constant 0 : i32
    %c0_i32_0 = arith.constant 0 : i32
    %c0_i32_1 = arith.constant 0 : i32
    return %arg0, %arg1, %c0_i32, %c0_i32_0 : i32, i32, i32, i32
  }
  func.func @transform_3(%arg0: i32, %arg1: i32) -> (i32, i32, i32, i32) {
    %c0_i32 = arith.constant 0 : i32
    %c0_i32_0 = arith.constant 0 : i32
    %c0_i32_1 = arith.constant 0 : i32
    return %arg0, %arg1, %c0_i32, %c0_i32_0 : i32, i32, i32, i32
  }
  func.func @transform_4(%arg0: i32, %arg1: i32) -> (i32, i32, i32, i32) {
    %c0_i32 = arith.constant 0 : i32
    %c0_i32_0 = arith.constant 0 : i32
    %c0_i32_1 = arith.constant 0 : i32
    return %arg0, %arg1, %c0_i32, %c0_i32_0 : i32, i32, i32, i32
  }
}

</mosaic_0001>

<llo_original>
// kernel: tpu_custom_call.1
$region0: #{tpu_custom_call.1}
  #allocation0 [shape = 'u32[]', space=smem, size = 0x4, offset = 0x4, fixed_abs, tag = 'smem constant byte address 0x4 - core index']
  #allocation1 [shape = 'u32[72,128]{1,0:T(1,128)}', space=vmem, size = 0x9000, scoped, tag = 'internal scratch']
  %s0 = inlined_call_operand.hbm [shape: f32[2,4,32,128], index: 0, kind: input, shape index: {}]
  %s1 = inlined_call_operand.hbm [shape: s8[2,1,32,128], index: 1, kind: input, shape index: {}]
  %s2 = inlined_call_operand.hbm [shape: f32[2,1,1,128], index: 2, kind: output, shape index: {0}]
  %s3 = inlined_call_operand.hbm [shape: f32[2,1,4,128], index: 3, kind: output, shape index: {1}]
  %s4 = inlined_call_operand.hbm [shape: f32[2,1,4,128], index: 4, kind: output, shape index: {2}]
  %5 = xla_tuple %s2, %s3, %s4
  %s6 = sld [smem:[#allocation0]]
  $region65: #{tpu_custom_call.1} parent=0
    _
  %s8 = ssub.s32 1, %s6
  %s9 = scalar_select 0, %s8, %s6
  $region1: #{tpu_custom_call.1} parent=0
    #allocation2 [shape = 'u8[131072]{0}', space=vmem, size = 0x20000, scoped, tag = 'input window, operand 0']
    #allocation3 [shape = 's32[2]{0}', space=sflag, size = 0x8, scoped, tag = 'scoped memory for tpu_custom_call.1']
    #allocation4 [shape = 's32[2]{0}', space=sflag, size = 0x8, scoped, tag = 'scoped memory for tpu_custom_call.1']
    #allocation5 [shape = 'u8[8192]{0}', space=vmem, size = 0x2000, scoped, tag = 'input window, operand 1']
    #allocation6 [shape = 's32[2]{0}', space=sflag, size = 0x8, scoped, tag = 'scoped memory for tpu_custom_call.1']
    #allocation7 [shape = 'u8[1024]{0}', space=vmem, size = 0x400, scoped, tag = 'output window, operand 0']
    #allocation8 [shape = 'u8[4096]{0}', space=vmem, size = 0x1000, scoped, tag = 'output window, operand 1']
    #allocation9 [shape = 's32[2]{0}', space=sflag, size = 0x8, scoped, tag = 'scoped memory for tpu_custom_call.1']
    #allocation10 [shape = 'u8[4096]{0}', space=vmem, size = 0x1000, scoped, tag = 'output window, operand 2']
    %10 = vsyncpa [#allocation3], 0
    %s11 = scalar_lea.sflag [#allocation3], 1
    %12 = vsyncpa %s11, 0
    %13 = vsyncpa [#allocation6], 0
    %s14 = scalar_lea.sflag [#allocation6], 1
    %15 = vsyncpa %s14, 0
    %16 = vsyncpa [#allocation4], 0
    %s17 = scalar_lea.sflag [#allocation4], 1
    %18 = vsyncpa %s17, 0
    %19 = vsyncpa [#allocation9], 0
    %s20 = scalar_lea.sflag [#allocation9], 1
    %21 = vsyncpa %s20, 0
    loop: start=0, step=1, limit=4
    $region2: #{tpu_custom_call.1} parent=1 // loop_pre_header
      _
    $region3: #{tpu_custom_call.1} parent=1 // loop_header
      %s23 = sphi 0, %s27
      %p24 = scmp.ge.s32.totalorder %s23, 4
      %s30 = sphi 0, %s42
      %s31 = sphi 0, %s38
      %s32 = sphi 0, %s30
      %s33 = sphi 0, %s31
      %s34 = sphi 0, %s32
      %s35 = sphi 0, %s33
      %s47 = sphi 0, %s49
      %s50 = sphi 0, %s47
      %s51 = sphi 0, %s50
      %s67 = sphi 0, %s51
      %s75 = sphi 0, %s77
      %s78 = sphi 0, %s75
      %s79 = sphi 0, %s78
      %s95 = sphi 0, %s79
      %s103 = sphi 0, %s105
      %s106 = sphi 0, %s103
      %s107 = sphi 0, %s106
      %s123 = sphi 0, %s107
      %s131 = sphi 0, %s133
      %s134 = sphi 0, %s131
      %s135 = sphi 0, %s134
      %s151 = sphi 0, %s135
      %s159 = sphi 0, %s161
      %s162 = sphi 0, %s159
      %s163 = sphi 0, %s162
      %s179 = sphi 0, %s163
    $region4: #{tpu_custom_call.1} parent=1 // loop_header_branch
      %26 = sbr.rel (%p24) target = $region8
    $region5: #{tpu_custom_call.1} parent=1 // loop_body
      %s28 = ssub.s32 %s23, 1
      %s29 = ssub.s32 %s23, 2
      %s36 = sadd.s32 1, %s31
      %p37 = scmp.ge.s32.totalorder %s36, 1
      %s38 = scalar_select %p37, 0, %s36
      %s39 = sadd.s32 1, %s30
      %s40 = scalar_select %p37, %s39, %s30
      %p41 = scmp.ge.s32.totalorder %s40, 2
      %s42 = scalar_select %p41, 0, %s40
      %s43 = ssub.s32 %s30, %s42
      %s44 = ssub.s32 %s31, %s38
      %s45 = sor.u32 %s43, %s44
      %p46 = scmp.eq.s32.totalorder %s45, 0
      %s48 = sadd.s32 %s47, 1
      %s49 = scalar_select %p46, %s47, %s48
      %p52 = pneg %p46
      %p53 = scmp.eq.s32.totalorder %s23, 1
      %p54 = por %p52, %p53
      %p55 = scmp.ne.s32.totalorder %s47, %s50
      %p56 = scmp.eq.s32.totalorder %s23, 0
      %p57 = por %p55, %p56
      %p58 = scmp.ne.s32.totalorder %s47, %s50
      %p59 = scmp.eq.s32.totalorder %s28, 1
      %p60 = por %p58, %p59
      %p61 = scmp.ne.s32.totalorder %s50, %s51
      %p62 = scmp.eq.s32.totalorder %s28, 0
      %p63 = por %p61, %p62
      %p64 = scmp.ne.s32.totalorder %s50, %s51
      %p65 = scmp.eq.s32.totalorder %s29, 1
      %p66 = por %p64, %p65
      %p68 = scmp.ne.s32.totalorder %s51, %s67
      %p69 = scmp.eq.s32.totalorder %s29, 0
      %p70 = por %p68, %p69
      %s71 = ssub.s32 %s30, %s42
      %s72 = ssub.s32 %s31, %s38
      %s73 = sor.u32 %s71, %s72
      %p74 = scmp.eq.s32.totalorder %s73, 0
      %s76 = sadd.s32 %s75, 1
      %s77 = scalar_select %p74, %s75, %s76
      %p80 = pneg %p74
      %p81 = scmp.eq.s32.totalorder %s23, 1
      %p82 = por %p80, %p81
      %p83 = scmp.ne.s32.totalorder %s75, %s78
      %p84 = scmp.eq.s32.totalorder %s23, 0
      %p85 = por %p83, %p84
      %p86 = scmp.ne.s32.totalorder %s75, %s78
      %p87 = scmp.eq.s32.totalorder %s28, 1
      %p88 = por %p86, %p87
      %p89 = scmp.ne.s32.totalorder %s78, %s79
      %p90 = scmp.eq.s32.totalorder %s28, 0
      %p91 = por %p89, %p90
      %p92 = scmp.ne.s32.totalorder %s78, %s79
      %p93 = scmp.eq.s32.totalorder %s29, 1
      %p94 = por %p92, %p93
      %p96 = scmp.ne.s32.totalorder %s79, %s95
      %p97 = scmp.eq.s32.totalorder %s29, 0
      %p98 = por %p96, %p97
      %s99 = ssub.s32 %s30, %s42
      %s100 = ssub.s32 %s31, %s38
      %s101 = sor.u32 %s99, %s100
      %p102 = scmp.eq.s32.totalorder %s101, 0
      %s104 = sadd.s32 %s103, 1
      %s105 = scalar_select %p102, %s103, %s104
      %p108 = pneg %p102
      %p109 = scmp.eq.s32.totalorder %s23, 1
      %p110 = por %p108, %p109
      %p111 = scmp.ne.s32.totalorder %s103, %s106
      %p112 = scmp.eq.s32.totalorder %s23, 0
      %p113 = por %p111, %p112
      %p114 = scmp.ne.s32.totalorder %s103, %s106
      %p115 = scmp.eq.s32.totalorder %s28, 1
      %p116 = por %p114, %p115
      %p117 = scmp.ne.s32.totalorder %s106, %s107
      %p118 = scmp.eq.s32.totalorder %s28, 0
      %p119 = por %p117, %p118
      %p120 = scmp.ne.s32.totalorder %s106, %s107
      %p121 = scmp.eq.s32.totalorder %s29, 1
      %p122 = por %p120, %p121
      %p124 = scmp.ne.s32.totalorder %s107, %s123
      %p125 = scmp.eq.s32.totalorder %s29, 0
      %p126 = por %p124, %p125
      %s127 = ssub.s32 %s30, %s42
      %s128 = ssub.s32 %s31, %s38
      %s129 = sor.u32 %s127, %s128
      %p130 = scmp.eq.s32.totalorder %s129, 0
      %s132 = sadd.s32 %s131, 1
      %s133 = scalar_select %p130, %s131, %s132
      %p136 = pneg %p130
      %p137 = scmp.eq.s32.totalorder %s23, 1
      %p138 = por %p136, %p137
      %p139 = scmp.ne.s32.totalorder %s131, %s134
      %p140 = scmp.eq.s32.totalorder %s23, 0
      %p141 = por %p139, %p140
      %p142 = scmp.ne.s32.totalorder %s131, %s134
      %p143 = scmp.eq.s32.totalorder %s28, 1
      %p144 = por %p142, %p143
      %p145 = scmp.ne.s32.totalorder %s134, %s135
      %p146 = scmp.eq.s32.totalorder %s28, 0
      %p147 = por %p145, %p146
      %p148 = scmp.ne.s32.totalorder %s134, %s135
      %p149 = scmp.eq.s32.totalorder %s29, 1
      %p150 = por %p148, %p149
      %p152 = scmp.ne.s32.totalorder %s135, %s151
      %p153 = scmp.eq.s32.totalorder %s29, 0
      %p154 = por %p152, %p153
      %s155 = ssub.s32 %s30, %s42
      %s156 = ssub.s32 %s31, %s38
      %s157 = sor.u32 %s155, %s156
      %p158 = scmp.eq.s32.totalorder %s157, 0
      %s160 = sadd.s32 %s159, 1
      %s161 = scalar_select %p158, %s159, %s160
      %p164 = pneg %p158
      %p165 = scmp.eq.s32.totalorder %s23, 1
      %p166 = por %p164, %p165
      %p167 = scmp.ne.s32.totalorder %s159, %s162
      %p168 = scmp.eq.s32.totalorder %s23, 0
      %p169 = por %p167, %p168
      %p170 = scmp.ne.s32.totalorder %s159, %s162
      %p171 = scmp.eq.s32.totalorder %s28, 1
      %p172 = por %p170, %p171
      %p173 = scmp.ne.s32.totalorder %s162, %s163
      %p174 = scmp.eq.s32.totalorder %s28, 0
      %p175 = por %p173, %p174
      %p176 = scmp.ne.s32.totalorder %s162, %s163
      %p177 = scmp.eq.s32.totalorder %s29, 1
      %p178 = por %p176, %p177
      %p180 = scmp.ne.s32.totalorder %s163, %s179
      %p181 = scmp.eq.s32.totalorder %s29, 0
      %p182 = por %p180, %p181
      %p183 = scmp.le.s32.totalorder 1, %s23
      %p184 = scmp.lt.s32.totalorder %s23, 3
      %p185 = pnand %p183, %p184
      %p186 = pneg %p185
      // Predicated region
      $region9: #{tpu_custom_call.1} parent=5 // pred_check
        _
      $region10: #{tpu_custom_call.1} parent=5 // pred_check_branch
        %188 = sbr.rel (%p185) target = $region12
      $region11: #{tpu_custom_call.1} parent=5 // pred_region
        %s189 = ssub.s32 %s23, 1
      $region12: #{tpu_custom_call.1} parent=5 // pred_fallthru
        _
      %p190 = scmp.lt.s32.totalorder %s23, 2
      // Predicated region
      $region13: #{tpu_custom_call.1} parent=5 // pred_check
        %p191 = pneg %p190
      $region14: #{tpu_custom_call.1} parent=5 // pred_check_branch
        %193 = sbr.rel (%p191) target = $region16
      $region15: #{tpu_custom_call.1} parent=5 // pred_region
        // Predicated region
        $region17: #{tpu_custom_call.1} parent=15 // pred_check
          %p194 = pneg %p57
        $region18: #{tpu_custom_call.1} parent=15 // pred_check_branch
          %196 = sbr.rel (%p194) target = $region20
        $region19: #{tpu_custom_call.1} parent=15 // pred_region
          %s197 = sand.u32 %s47, 1
          %s198 = scalar_lea.sflag [#allocation3], %s197
          %s199 = sand.u32 %s47, 1
          %s200 = smul.addr %s199, 128
          %s201 = scalar_lea.vmem [#allocation2], %s200
          %s202 = smul.u32 4, %s31
          %204 = vsyncadd %s198, 0
          %s205 = smul.addr %s30, 16
          %s206 = sadd.s32 %s202, %s205
          %s207 = smul.addr %s206, 8
          %s208 = scalar_lea.hbm %s0, %s207
          %s209 = sshll.u32 %s208, 4
          %s210 = int_to_ptr.hbm [resolvable:$true] %s209
          %s211 = sshll.u32 %s201, 4
          %s212 = int_to_ptr.vmem [resolvable:$true] %s211
          %217 = dma.hbm_to_vmem [thread:$0]  %s210, 2048, %s212, %s198, 128, 128, 8
        $region20: #{tpu_custom_call.1} parent=15 // pred_fallthru
          _
        // Predicated region
        $region21: #{tpu_custom_call.1} parent=15 // pred_check
          %p218 = pneg %p85
        $region22: #{tpu_custom_call.1} parent=15 // pred_check_branch
          %220 = sbr.rel (%p218) target = $region24
        $region23: #{tpu_custom_call.1} parent=15 // pred_region
          %s221 = sand.u32 %s75, 1
          %s222 = scalar_lea.sflag [#allocation6], %s221
          %s223 = sand.u32 %s75, 1
          %s224 = smul.addr %s223, 8
          %s225 = scalar_lea.vmem [#allocation5], %s224
          %227 = vsyncadd %s222, 0
          %s228 = sadd.s32 %s31, %s30
          %s229 = smul.addr %s228, 8
          %s230 = scalar_lea.hbm %s1, %s229
          %s232 = sshll.u32 %s230, 4
          %s233 = int_to_ptr.hbm [resolvable:$true] %s232
          %s234 = sshll.u32 %s225, 4
          %s235 = int_to_ptr.vmem [resolvable:$true] %s234
          %237 = dma.hbm_to_vmem [thread:$0]  %s233, 128, %s235, %s222
        $region24: #{tpu_custom_call.1} parent=15 // pred_fallthru
          _
      $region16: #{tpu_custom_call.1} parent=5 // pred_fallthru
        _
      %p238 = scmp.le.s32.totalorder 1, %s23
      %p239 = scmp.lt.s32.totalorder %s23, 3
      %p240 = pnand %p238, %p239
      %p241 = pneg %p240
      // Predicated region
      $region25: #{tpu_custom_call.1} parent=5 // pred_check
        _
      $region26: #{tpu_custom_call.1} parent=5 // pred_check_branch
        %243 = sbr.rel (%p240) target = $region28
      $region27: #{tpu_custom_call.1} parent=5 // pred_region
        %s244 = ssub.s32 %s23, 1
        %s245 = sand.u32 %s50, 1
        %s246 = scalar_lea.sflag [#allocation3], %s245
        %s247 = sand.u32 %s50, 1
        %s248 = smul.addr %s247, 128
        %s249 = scalar_lea.vmem [#allocation2], %s248
        // Predicated region
        $region29: #{tpu_custom_call.1} parent=27 // pred_check
          %p250 = pneg %p63
        $region30: #{tpu_custom_call.1} parent=27 // pred_check_branch
          %252 = sbr.rel (%p250) target = $region32
        $region31: #{tpu_custom_call.1} parent=27 // pred_region
          %254 = dma.done %s246, 2048
        $region32: #{tpu_custom_call.1} parent=27 // pred_fallthru
          _
        %s255 = sand.u32 %s78, 1
        %s256 = scalar_lea.sflag [#allocation6], %s255
        %s257 = sand.u32 %s78, 1
        %s258 = smul.addr %s257, 8
        %s259 = scalar_lea.vmem [#allocation5], %s258
        // Predicated region
        $region33: #{tpu_custom_call.1} parent=27 // pred_check
          %p260 = pneg %p91
        $region34: #{tpu_custom_call.1} parent=27 // pred_check_branch
          %262 = sbr.rel (%p260) target = $region36
        $region35: #{tpu_custom_call.1} parent=27 // pred_region
          %264 = dma.done %s256, 128
        $region36: #{tpu_custom_call.1} parent=27 // pred_fallthru
          _
        %s265 = sand.u32 %s50, 1
        %s266 = scalar_lea.sflag [#allocation3], %s265
        %s267 = sand.u32 %s50, 1
        %s268 = smul.addr %s267, 128
        %s269 = scalar_lea.vmem [#allocation2], %s268
        %p270 = pneg %p63
        %p271 = pneg %p60
        %s272 = sand.u32 %s78, 1
        %s273 = scalar_lea.sflag [#allocation6], %s272
        %s274 = sand.u32 %s78, 1
        %s275 = smul.addr %s274, 8
        %s276 = scalar_lea.vmem [#allocation5], %s275
        %p277 = pneg %p91
        %p278 = pneg %p88
        %p279 = pneg %p119
        %p280 = pneg %p116
        %s281 = sand.u32 %s106, 1
        %s282 = scalar_lea.sflag [#allocation4], %s281
        %s283 = sand.u32 %s106, 1
        %s284 = scalar_lea.vmem [#allocation7], %s283
        %p285 = pneg %p147
        %p286 = pneg %p144
        %s287 = sand.u32 %s28, 1
        %s288 = scalar_lea.sflag [#allocation9], %s287
        %s289 = sand.u32 %s134, 1
        %s290 = smul.addr %s289, 4
        %s291 = scalar_lea.vmem [#allocation8], %s290
        %p292 = pneg %p175
        %p293 = pneg %p172
        %s294 = sand.u32 %s28, 1
        %s295 = scalar_lea.sflag [#allocation9], %s294
        %s296 = sand.u32 %s162, 1
        %s297 = smul.addr %s296, 4
        %s298 = scalar_lea.vmem [#allocation10], %s297
        %s299 = smul.u32 4, %s33
        %v300 = vld [vmem:[%s249] sm:$0xff]
        %v301 = vld [vmem:[%s249 + $0x8] sm:$0xff]
        %v302 = vld [vmem:[%s249 + $0x10] sm:$0xff]
        %v303 = vld [vmem:[%s249 + $0x18] sm:$0xff]
        %v304 = vld [vmem:[%s249 + $0x20] sm:$0xff]
        %v305 = vld [vmem:[%s249 + $0x28] sm:$0xff]
        %v306 = vld [vmem:[%s249 + $0x30] sm:$0xff]
        %v307 = vld [vmem:[%s249 + $0x38] sm:$0xff]
        %v308 = vld [vmem:[%s249 + $0x40] sm:$0xff]
        %v309 = vld [vmem:[%s249 + $0x48] sm:$0xff]
        %v310 = vld [vmem:[%s249 + $0x50] sm:$0xff]
        %v311 = vld [vmem:[%s249 + $0x58] sm:$0xff]
        %v312 = vld [vmem:[%s249 + $0x60] sm:$0xff]
        %v313 = vld [vmem:[%s249 + $0x68] sm:$0xff]
        %v314 = vld [vmem:[%s249 + $0x70] sm:$0xff]
        %v315 = vld [vmem:[%s249 + $0x78] sm:$0xff]
        %v316 = vld [vmem:[%s259] sm:$0xff]
        %v317 = vunpack.c.0.s8 %v316
        %v318 = vunpack.c.1.s8 %v316
        %v319 = vunpack.c.2.s8 %v316
        %v320 = vunpack.c.3.s8 %v316
        %vm321 = vcmp.eq.s32.totalorder %v317, 0
        %vm322 = vcmp.eq.s32.totalorder %v318, 0
        %vm323 = vcmp.eq.s32.totalorder %v319, 0
        %vm324 = vcmp.eq.s32.totalorder %v320, 0
        %vm325 = vcmp.eq.s32.totalorder %v317, 1
        %vm326 = vcmp.eq.s32.totalorder %v318, 1
        %vm327 = vcmp.eq.s32.totalorder %v319, 1
        %vm328 = vcmp.eq.s32.totalorder %v320, 1
        %vm329 = vcmp.eq.s32.totalorder %v317, 2
        %vm330 = vcmp.eq.s32.totalorder %v318, 2
        %vm331 = vcmp.eq.s32.totalorder %v319, 2
        %vm332 = vcmp.eq.s32.totalorder %v320, 2
        %vm333 = vcmp.eq.s32.totalorder %v317, 3
        %vm334 = vcmp.eq.s32.totalorder %v318, 3
        %vm335 = vcmp.eq.s32.totalorder %v319, 3
        %vm336 = vcmp.eq.s32.totalorder %v320, 3
        %vm337 = vcmp.ge.s32.totalorder %v317, 0
        %vm338 = vcmp.ge.s32.totalorder %v318, 0
        %vm339 = vcmp.ge.s32.totalorder %v319, 0
        %vm340 = vcmp.ge.s32.totalorder %v320, 0
        %v341 = vmax.f32 %v300, %v304
        %v342 = vmax.f32 %v341, %v308
        %v343 = vmax.f32 %v342, %v312
        %v344 = vmax.f32 %v301, %v305
        %v345 = vmax.f32 %v344, %v309
        %v346 = vmax.f32 %v345, %v313
        %v347 = vmax.f32 %v302, %v306
        %v348 = vmax.f32 %v347, %v310
        %v349 = vmax.f32 %v348, %v314
        %v350 = vmax.f32 %v303, %v307
        %v351 = vmax.f32 %v350, %v311
        %v352 = vmax.f32 %v351, %v315
        %v353 = vsub.f32 %v300, %v343
        %v354 = vsub.f32 %v301, %v346
        %v355 = vsub.f32 %v302, %v349
        %v356 = vsub.f32 %v303, %v352
        %v357 = vsub.f32 %v304, %v343
        %v358 = vsub.f32 %v305, %v346
        %v359 = vsub.f32 %v306, %v349
        %v360 = vsub.f32 %v307, %v352
        %v361 = vsub.f32 %v308, %v343
        %v362 = vsub.f32 %v309, %v346
        %v363 = vsub.f32 %v310, %v349
        %v364 = vsub.f32 %v311, %v352
        %v365 = vsub.f32 %v312, %v343
        %v366 = vsub.f32 %v313, %v346
        %v367 = vsub.f32 %v314, %v349
        %v368 = vsub.f32 %v315, %v352
        %v369 = vmul.f32 %v353, 1.442695
        %v370 = vpow.pop %v369
        %v371 = vmul.f32 %v354, 1.442695
        %v372 = vpow.pop %v371
        %v373 = vmul.f32 %v355, 1.442695
        %v374 = vpow.pop %v373
        %v375 = vmul.f32 %v356, 1.442695
        %v376 = vpow.pop %v375
        %v377 = vmul.f32 %v357, 1.442695
        %v378 = vpow.pop %v377
        %v379 = vmul.f32 %v358, 1.442695
        %v380 = vpow.pop %v379
        %v381 = vmul.f32 %v359, 1.442695
        %v382 = vpow.pop %v381
        %v383 = vmul.f32 %v360, 1.442695
        %v384 = vpow.pop %v383
        %v385 = vmul.f32 %v361, 1.442695
        %v386 = vpow.pop %v385
        %v387 = vmul.f32 %v362, 1.442695
        %v388 = vpow.pop %v387
        %v389 = vmul.f32 %v363, 1.442695
        %v390 = vpow.pop %v389
        %v391 = vmul.f32 %v364, 1.442695
        %v392 = vpow.pop %v391
        %v393 = vmul.f32 %v365, 1.442695
        %v394 = vpow.pop %v393
        %v395 = vmul.f32 %v366, 1.442695
        %v396 = vpow.pop %v395
        %v397 = vmul.f32 %v367, 1.442695
        %v398 = vpow.pop %v397
        %v399 = vmul.f32 %v368, 1.442695
        %v400 = vpow.pop %v399
        %v401 = vadd.f32 %v370, %v378
        %v402 = vadd.f32 %v401, %v386
        %v403 = vadd.f32 %v402, %v394
        %v404 = vadd.f32 %v372, %v380
        %v405 = vadd.f32 %v404, %v388
        %v406 = vadd.f32 %v405, %v396
        %v407 = vadd.f32 %v374, %v382
        %v408 = vadd.f32 %v407, %v390
        %v409 = vadd.f32 %v408, %v398
        %v410 = vadd.f32 %v376, %v384
        %v411 = vadd.f32 %v410, %v392
        %v412 = vadd.f32 %v411, %v400
        %v413 = vrcp.pop %v403
        %v414 = vmul.f32 %v403, %v413
        %v415 = vsub.f32 1.0, %v414
        %v416 = vmul.f32 %v413, %v415
        %v417 = vadd.f32 %v413, %v416
        %vm418 = vweird.f32 %v403
        %vm419 = vweird.f32 %v413
        %vm420 = vmor %vm418, %vm419
        %v421 = vsel %vm420, %v413, %v417
        %v422 = vand.u32 2147483647, %v403
        %vm423 = vcmp.eq.f32.partialorder %v422, 8.507059e+37
        %v424 = vand.u32 %v403, 2147483648
        %v425 = vor.u32 1.1754944e-38, %v424
        %v426 = vsel %vm423, %v425, %v421
        %v427 = vmul.f32 1.0, %v426
        %v428 = vrcp.pop %v406
        %v429 = vmul.f32 %v406, %v428
        %v430 = vsub.f32 1.0, %v429
        %v431 = vmul.f32 %v428, %v430
        %v432 = vadd.f32 %v428, %v431
        %vm433 = vweird.f32 %v406
        %vm434 = vweird.f32 %v428
        %vm435 = vmor %vm433, %vm434
        %v436 = vsel %vm435, %v428, %v432
        %v437 = vand.u32 2147483647, %v406
        %vm438 = vcmp.eq.f32.partialorder %v437, 8.507059e+37
        %v439 = vand.u32 %v406, 2147483648
        %v440 = vor.u32 1.1754944e-38, %v439
        %v441 = vsel %vm438, %v440, %v436
        %v442 = vmul.f32 1.0, %v441
        %v443 = vrcp.pop %v409
        %v444 = vmul.f32 %v409, %v443
        %v445 = vsub.f32 1.0, %v444
        %v446 = vmul.f32 %v443, %v445
        %v447 = vadd.f32 %v443, %v446
        %vm448 = vweird.f32 %v409
        %vm449 = vweird.f32 %v443
        %vm450 = vmor %vm448, %vm449
        %v451 = vsel %vm450, %v443, %v447
        %v452 = vand.u32 2147483647, %v409
        %vm453 = vcmp.eq.f32.partialorder %v452, 8.507059e+37
        %v454 = vand.u32 %v409, 2147483648
        %v455 = vor.u32 1.1754944e-38, %v454
        %v456 = vsel %vm453, %v455, %v451
        %v457 = vmul.f32 1.0, %v456
        %v458 = vrcp.pop %v412
        %v459 = vmul.f32 %v412, %v458
        %v460 = vsub.f32 1.0, %v459
        %v461 = vmul.f32 %v458, %v460
        %v462 = vadd.f32 %v458, %v461
        %vm463 = vweird.f32 %v412
        %vm464 = vweird.f32 %v458
        %vm465 = vmor %vm463, %vm464
        %v466 = vsel %vm465, %v458, %v462
        %v467 = vand.u32 2147483647, %v412
        %vm468 = vcmp.eq.f32.partialorder %v467, 8.507059e+37
        %v469 = vand.u32 %v412, 2147483648
        %v470 = vor.u32 1.1754944e-38, %v469
        %v471 = vsel %vm468, %v470, %v466
        %v472 = vmul.f32 1.0, %v471
        %v473 = vmul.f32 %v370, %v427
        %v474 = vmul.f32 %v372, %v442
        %v475 = vmul.f32 %v374, %v457
        %v476 = vmul.f32 %v376, %v472
        %v477 = vmul.f32 %v378, %v427
        %v478 = vmul.f32 %v380, %v442
        %v479 = vmul.f32 %v382, %v457
        %v480 = vmul.f32 %v384, %v472
        %v481 = vmul.f32 %v386, %v427
        %v482 = vmul.f32 %v388, %v442
        %v483 = vmul.f32 %v390, %v457
        %v484 = vmul.f32 %v392, %v472
        %v485 = vmul.f32 %v394, %v427
        %v486 = vmul.f32 %v396, %v442
        %v487 = vmul.f32 %v398, %v457
        %v488 = vmul.f32 %v400, %v472
        %v489 = vsel %vm321, %v300, 0.0
        %v490 = vsel %vm322, %v301, 0.0
        %v491 = vsel %vm323, %v302, 0.0
        %v492 = vsel %vm324, %v303, 0.0
        %v493 = vsel %vm325, %v304, 0.0
        %v494 = vsel %vm326, %v305, 0.0
        %v495 = vsel %vm327, %v306, 0.0
        %v496 = vsel %vm328, %v307, 0.0
        %v497 = vsel %vm329, %v308, 0.0
        %v498 = vsel %vm330, %v309, 0.0
        %v499 = vsel %vm331, %v310, 0.0
        %v500 = vsel %vm332, %v311, 0.0
        %v501 = vsel %vm333, %v312, 0.0
        %v502 = vsel %vm334, %v313, 0.0
        %v503 = vsel %vm335, %v314, 0.0
        %v504 = vsel %vm336, %v315, 0.0
        %v505 = vadd.f32 %v489, %v493
        %v506 = vadd.f32 %v505, %v497
        %v507 = vadd.f32 %v506, %v501
        %v508 = vadd.f32 %v490, %v494
        %v509 = vadd.f32 %v508, %v498
        %v510 = vadd.f32 %v509, %v502
        %v511 = vadd.f32 %v491, %v495
        %v512 = vadd.f32 %v511, %v499
        %v513 = vadd.f32 %v512, %v503
        %v514 = vadd.f32 %v492, %v496
        %v515 = vadd.f32 %v514, %v500
        %v516 = vadd.f32 %v515, %v504
        %v517 = vlog2.pop %v403
        %v518 = vmul.f32 %v517, 0.6931472
        %v519 = vlog2.pop %v406
        %v520 = vmul.f32 %v519, 0.6931472
        %v521 = vlog2.pop %v409
        %v522 = vmul.f32 %v521, 0.6931472
        %v523 = vlog2.pop %v412
        %v524 = vmul.f32 %v523, 0.6931472
        %v525 = vadd.f32 %v518, %v343
        %v526 = vadd.f32 %v520, %v346
        %v527 = vadd.f32 %v522, %v349
        %v528 = vadd.f32 %v524, %v352
        %v529 = vsub.f32 %v525, %v507
        %v530 = vsub.f32 %v526, %v510
        %v531 = vsub.f32 %v527, %v513
        %v532 = vsub.f32 %v528, %v516
        %v533 = vsel %vm337, %v529, 0.0
        %v534 = vsel %vm338, %v530, 0.0
        %v535 = vsel %vm339, %v531, 0.0
        %v536 = vsel %vm340, %v532, 0.0
        %v537 = vadd.f32 %v533, %v534
        %v538 = vadd.f32 %v537, %v535
        %v539 = vadd.f32 %v538, %v536
        %v540 = vrot.slane %v539, 4
        %v541 = vadd.f32 %v539, %v540
        %v542 = vrot.slane %v541, 2
        %v543 = vadd.f32 %v541, %v542
        %v544 = vrot.slane %v543, 1
        %v545 = vadd.f32 %v543, %v544
        %546 = vst [vmem:[%s284] sm:$0x1] %v545
        %v547 = vsel %vm321, %v473, 0.0
        %v548 = vsel %vm322, %v474, 0.0
        %v549 = vsel %vm323, %v475, 0.0
        %v550 = vsel %vm324, %v476, 0.0
        %v551 = vsel %vm325, %v477, 0.0
        %v552 = vsel %vm326, %v478, 0.0
        %v553 = vsel %vm327, %v479, 0.0
        %v554 = vsel %vm328, %v480, 0.0
        %v555 = vsel %vm329, %v481, 0.0
        %v556 = vsel %vm330, %v482, 0.0
        %v557 = vsel %vm331, %v483, 0.0
        %v558 = vsel %vm332, %v484, 0.0
        %v559 = vsel %vm333, %v485, 0.0
        %v560 = vsel %vm334, %v486, 0.0
        %v561 = vsel %vm335, %v487, 0.0
        %v562 = vsel %vm336, %v488, 0.0
        %v563 = vadd.f32 %v547, %v548
        %v564 = vadd.f32 %v563, %v549
        %v565 = vadd.f32 %v564, %v550
        %v566 = vrot.slane %v565, 4
        %v567 = vadd.f32 %v565, %v566
        %v568 = vrot.slane %v567, 2
        %v569 = vadd.f32 %v567, %v568
        %v570 = vrot.slane %v569, 1
        %v571 = vadd.f32 %v569, %v570
        %v572 = vadd.f32 %v551, %v552
        %v573 = vadd.f32 %v572, %v553
        %v574 = vadd.f32 %v573, %v554
        %v575 = vrot.slane %v574, 4
        %v576 = vadd.f32 %v574, %v575
        %v577 = vrot.slane %v576, 2
        %v578 = vadd.f32 %v576, %v577
        %v579 = vrot.slane %v578, 1
        %v580 = vadd.f32 %v578, %v579
        %v581 = vadd.f32 %v555, %v556
        %v582 = vadd.f32 %v581, %v557
        %v583 = vadd.f32 %v582, %v558
        %v584 = vrot.slane %v583, 4
        %v585 = vadd.f32 %v583, %v584
        %v586 = vrot.slane %v585, 2
        %v587 = vadd.f32 %v585, %v586
        %v588 = vrot.slane %v587, 1
        %v589 = vadd.f32 %v587, %v588
        %v590 = vadd.f32 %v559, %v560
        %v591 = vadd.f32 %v590, %v561
        %v592 = vadd.f32 %v591, %v562
        %v593 = vrot.slane %v592, 4
        %v594 = vadd.f32 %v592, %v593
        %v595 = vrot.slane %v594, 2
        %v596 = vadd.f32 %v594, %v595
        %v597 = vrot.slane %v596, 1
        %v598 = vadd.f32 %v596, %v597
        %vm603 = vcmask 1041409
        %v604 = vsel %vm603, %v580, %v571
        %vm605 = vcmask 1042434
        %v606 = vsel %vm605, %v589, %v604
        %vm607 = vcmask 1043459
        %v608 = vsel %vm607, %v598, %v606
        %610 = vst [vmem:[%s291] sm:$0xf] %v608
        %v611 = vsel %vm337, 1, 0
        %v612 = vsel %vm338, 1, 0
        %v613 = vsel %vm339, 1, 0
        %v614 = vsel %vm340, 1, 0
        %vm615 = vcmp.eq.s32.totalorder %v611, 1
        %vm616 = vcmp.eq.s32.totalorder %v612, 1
        %vm617 = vcmp.eq.s32.totalorder %v613, 1
        %vm618 = vcmp.eq.s32.totalorder %v614, 1
        %v619 = vsel %vm615, %v473, 0.0
        %v620 = vsel %vm616, %v474, 0.0
        %v621 = vsel %vm617, %v475, 0.0
        %v622 = vsel %vm618, %v476, 0.0
        %v623 = vsel %vm615, %v477, 0.0
        %v624 = vsel %vm616, %v478, 0.0
        %v625 = vsel %vm617, %v479, 0.0
        %v626 = vsel %vm618, %v480, 0.0
        %v627 = vsel %vm615, %v481, 0.0
        %v628 = vsel %vm616, %v482, 0.0
        %v629 = vsel %vm617, %v483, 0.0
        %v630 = vsel %vm618, %v484, 0.0
        %v631 = vsel %vm615, %v485, 0.0
        %v632 = vsel %vm616, %v486, 0.0
        %v633 = vsel %vm617, %v487, 0.0
        %v634 = vsel %vm618, %v488, 0.0
        %v635 = vadd.f32 %v619, %v620
        %v636 = vadd.f32 %v635, %v621
        %v637 = vadd.f32 %v636, %v622
        %v638 = vrot.slane %v637, 4
        %v639 = vadd.f32 %v637, %v638
        %v640 = vrot.slane %v639, 2
        %v641 = vadd.f32 %v639, %v640
        %v642 = vrot.slane %v641, 1
        %v643 = vadd.f32 %v641, %v642
        %v644 = vadd.f32 %v623, %v624
        %v645 = vadd.f32 %v644, %v625
        %v646 = vadd.f32 %v645, %v626
        %v647 = vrot.slane %v646, 4
        %v648 = vadd.f32 %v646, %v647
        %v649 = vrot.slane %v648, 2
        %v650 = vadd.f32 %v648, %v649
        %v651 = vrot.slane %v650, 1
        %v652 = vadd.f32 %v650, %v651
        %v653 = vadd.f32 %v627, %v628
        %v654 = vadd.f32 %v653, %v629
        %v655 = vadd.f32 %v654, %v630
        %v656 = vrot.slane %v655, 4
        %v657 = vadd.f32 %v655, %v656
        %v658 = vrot.slane %v657, 2
        %v659 = vadd.f32 %v657, %v658
        %v660 = vrot.slane %v659, 1
        %v661 = vadd.f32 %v659, %v660
        %v662 = vadd.f32 %v631, %v632
        %v663 = vadd.f32 %v662, %v633
        %v664 = vadd.f32 %v663, %v634
        %v665 = vrot.slane %v664, 4
        %v666 = vadd.f32 %v664, %v665
        %v667 = vrot.slane %v666, 2
        %v668 = vadd.f32 %v666, %v667
        %v669 = vrot.slane %v668, 1
        %v670 = vadd.f32 %v668, %v669
        %v671 = vsel %vm321, 1.0, 0.0
        %v672 = vsel %vm322, 1.0, 0.0
        %v673 = vsel %vm323, 1.0, 0.0
        %v674 = vsel %vm324, 1.0, 0.0
        %v675 = vsel %vm325, 1.0, 0.0
        %v676 = vsel %vm326, 1.0, 0.0
        %v677 = vsel %vm327, 1.0, 0.0
        %v678 = vsel %vm328, 1.0, 0.0
        %v679 = vsel %vm329, 1.0, 0.0
        %v680 = vsel %vm330, 1.0, 0.0
        %v681 = vsel %vm331, 1.0, 0.0
        %v682 = vsel %vm332, 1.0, 0.0
        %v683 = vsel %vm333, 1.0, 0.0
        %v684 = vsel %vm334, 1.0, 0.0
        %v685 = vsel %vm335, 1.0, 0.0
        %v686 = vsel %vm336, 1.0, 0.0
        %v687 = vadd.f32 %v671, %v672
        %v688 = vadd.f32 %v687, %v673
        %v689 = vadd.f32 %v688, %v674
        %v690 = vrot.slane %v689, 4
        %v691 = vadd.f32 %v689, %v690
        %v692 = vrot.slane %v691, 2
        %v693 = vadd.f32 %v691, %v692
        %v694 = vrot.slane %v693, 1
        %v695 = vadd.f32 %v693, %v694
        %v696 = vadd.f32 %v675, %v676
        %v697 = vadd.f32 %v696, %v677
        %v698 = vadd.f32 %v697, %v678
        %v699 = vrot.slane %v698, 4
        %v700 = vadd.f32 %v698, %v699
        %v701 = vrot.slane %v700, 2
        %v702 = vadd.f32 %v700, %v701
        %v703 = vrot.slane %v702, 1
        %v704 = vadd.f32 %v702, %v703
        %v705 = vadd.f32 %v679, %v680
        %v706 = vadd.f32 %v705, %v681
        %v707 = vadd.f32 %v706, %v682
        %v708 = vrot.slane %v707, 4
        %v709 = vadd.f32 %v707, %v708
        %v710 = vrot.slane %v709, 2
        %v711 = vadd.f32 %v709, %v710
        %v712 = vrot.slane %v711, 1
        %v713 = vadd.f32 %v711, %v712
        %v714 = vadd.f32 %v683, %v684
        %v715 = vadd.f32 %v714, %v685
        %v716 = vadd.f32 %v715, %v686
        %v717 = vrot.slane %v716, 4
        %v718 = vadd.f32 %v716, %v717
        %v719 = vrot.slane %v718, 2
        %v720 = vadd.f32 %v718, %v719
        %v721 = vrot.slane %v720, 1
        %v722 = vadd.f32 %v720, %v721
        %v723 = vadd.f32 %v643, %v695
        %v724 = vadd.f32 %v652, %v704
        %v725 = vadd.f32 %v661, %v713
        %v726 = vadd.f32 %v670, %v722
        %v731 = vsel %vm603, %v724, %v723
        %v732 = vsel %vm605, %v725, %v731
        %v733 = vsel %vm607, %v726, %v732
        %735 = vst [vmem:[%s298] sm:$0xf] %v733
        %s736 = sand.u32 %s106, 1
        %s737 = scalar_lea.sflag [#allocation4], %s736
        %s738 = sand.u32 %s106, 1
        %s739 = scalar_lea.vmem [#allocation7], %s738
        %s740 = sand.u32 %s28, 1
        %s741 = scalar_lea.sflag [#allocation9], %s740
        %s742 = sand.u32 %s134, 1
        %s743 = smul.addr %s742, 4
        %s744 = scalar_lea.vmem [#allocation8], %s743
        %s745 = sand.u32 %s28, 1
        %s746 = scalar_lea.sflag [#allocation9], %s745
        %s747 = sand.u32 %s162, 1
        %s748 = smul.addr %s747, 4
        %s749 = scalar_lea.vmem [#allocation10], %s748
        // Predicated region
        $region37: #{tpu_custom_call.1} parent=27 // pred_check
          %p750 = pneg %p116
        $region38: #{tpu_custom_call.1} parent=27 // pred_check_branch
          %752 = sbr.rel (%p750) target = $region40
        $region39: #{tpu_custom_call.1} parent=27 // pred_region
          %754 = vsyncadd %s737, 0
          %s755 = sadd.s32 %s33, %s32
          %s756 = scalar_lea.hbm %s2, %s755
          %s758 = sshll.u32 %s739, 4
          %s759 = int_to_ptr.vmem [resolvable:$true] %s758
          %s760 = sshll.u32 %s756, 4
          %s761 = int_to_ptr.hbm [resolvable:$true] %s760
          %763 = dma.vmem_to_hbm [thread:$0]  %s759, 16, %s761, %s737
        $region40: #{tpu_custom_call.1} parent=27 // pred_fallthru
          _
        // Predicated region
        $region41: #{tpu_custom_call.1} parent=27 // pred_check
          %p764 = pneg %p144
        $region42: #{tpu_custom_call.1} parent=27 // pred_check_branch
          %766 = sbr.rel (%p764) target = $region44
        $region43: #{tpu_custom_call.1} parent=27 // pred_region
          %768 = vsyncadd %s741, 0
          %s769 = sadd.s32 %s33, %s32
          %s770 = smul.addr %s769, 4
          %s771 = scalar_lea.hbm %s3, %s770
          %s773 = sshll.u32 %s744, 4
          %s774 = int_to_ptr.vmem [resolvable:$true] %s773
          %s775 = sshll.u32 %s771, 4
          %s776 = int_to_ptr.hbm [resolvable:$true] %s775
          %778 = dma.vmem_to_hbm [thread:$0]  %s774, 64, %s776, %s741
        $region44: #{tpu_custom_call.1} parent=27 // pred_fallthru
          _
        // Predicated region
        $region45: #{tpu_custom_call.1} parent=27 // pred_check
          %p779 = pneg %p172
        $region46: #{tpu_custom_call.1} parent=27 // pred_check_branch
          %781 = sbr.rel (%p779) target = $region48
        $region47: #{tpu_custom_call.1} parent=27 // pred_region
          %783 = vsyncadd %s746, 0
          %s784 = sadd.s32 %s33, %s32
          %s785 = smul.addr %s784, 4
          %s786 = scalar_lea.hbm %s4, %s785
          %s788 = sshll.u32 %s749, 4
          %s789 = int_to_ptr.vmem [resolvable:$true] %s788
          %s790 = sshll.u32 %s786, 4
          %s791 = int_to_ptr.hbm [resolvable:$true] %s790
          %793 = dma.vmem_to_hbm [thread:$0]  %s789, 64, %s791, %s746
        $region48: #{tpu_custom_call.1} parent=27 // pred_fallthru
          _
      $region28: #{tpu_custom_call.1} parent=5 // pred_fallthru
        _
      %p794 = scmp.le.s32.totalorder 2, %s23
      // Predicated region
      $region49: #{tpu_custom_call.1} parent=5 // pred_check
        %p795 = pneg %p794
      $region50: #{tpu_custom_call.1} parent=5 // pred_check_branch
        %797 = sbr.rel (%p795) target = $region52
      $region51: #{tpu_custom_call.1} parent=5 // pred_region
        %s798 = ssub.s32 %s23, 2
        // Predicated region
        $region53: #{tpu_custom_call.1} parent=51 // pred_check
          %p799 = pneg %p122
        $region54: #{tpu_custom_call.1} parent=51 // pred_check_branch
          %801 = sbr.rel (%p799) target = $region56
        $region55: #{tpu_custom_call.1} parent=51 // pred_region
          %s802 = sand.u32 %s107, 1
          %s803 = scalar_lea.sflag [#allocation4], %s802
          %s804 = sand.u32 %s107, 1
          %s805 = scalar_lea.vmem [#allocation7], %s804
          %807 = dma.done %s803, 16
        $region56: #{tpu_custom_call.1} parent=51 // pred_fallthru
          _
        // Predicated region
        $region57: #{tpu_custom_call.1} parent=51 // pred_check
          %p808 = pneg %p150
        $region58: #{tpu_custom_call.1} parent=51 // pred_check_branch
          %810 = sbr.rel (%p808) target = $region60
        $region59: #{tpu_custom_call.1} parent=51 // pred_region
          %s811 = sand.u32 %s29, 1
          %s812 = scalar_lea.sflag [#allocation9], %s811
          %s813 = sand.u32 %s135, 1
          %s814 = smul.addr %s813, 4
          %s815 = scalar_lea.vmem [#allocation8], %s814
          %817 = dma.done %s812, 64
        $region60: #{tpu_custom_call.1} parent=51 // pred_fallthru
          _
        // Predicated region
        $region61: #{tpu_custom_call.1} parent=51 // pred_check
          %p818 = pneg %p178
        $region62: #{tpu_custom_call.1} parent=51 // pred_check_branch
          %820 = sbr.rel (%p818) target = $region64
        $region63: #{tpu_custom_call.1} parent=51 // pred_region
          %s821 = sand.u32 %s29, 1
          %s822 = scalar_lea.sflag [#allocation9], %s821
          %s823 = sand.u32 %s163, 1
          %s824 = smul.addr %s823, 4
          %s825 = scalar_lea.vmem [#allocation10], %s824
          %827 = dma.done %s822, 64
        $region64: #{tpu_custom_call.1} parent=51 // pred_fallthru
          _
      $region52: #{tpu_custom_call.1} parent=5 // pred_fallthru
        _
    $region6: #{tpu_custom_call.1} parent=1 // loop_footer
      %s27 = sadd.s32 1, %s23
    $region7: #{tpu_custom_call.1} parent=1 // loop_footer_branch
      %22 = sbr.rel target = $region3
    $region8: #{tpu_custom_call.1} parent=1 // loop_exit
      _
    %828 = vsyncpa [#allocation3], 1
    %s829 = scalar_lea.sflag [#allocation3], 1
    %830 = vsyncpa %s829, 1
    %831 = vsyncpa [#allocation6], 1
    %s832 = scalar_lea.sflag [#allocation6], 1
    %833 = vsyncpa %s832, 1
    %834 = vsyncpa [#allocation4], 1
    %s835 = scalar_lea.sflag [#allocation4], 1
    %836 = vsyncpa %s835, 1
    %837 = vsyncpa [#allocation9], 1
    %s838 = scalar_lea.sflag [#allocation9], 1
    %839 = vsyncpa %s838, 1

</llo_original>
